<compile_context>
chip_gen: v7x
topology: tpu7x:2x2x1
jax: 0.10.0
libtpu: 0.0.40
codegen_flags: <defaults>
</compile_context>

<pallas_src>
import functools

import jax
import jax.numpy as jnp
from jax.experimental import pallas as pl
from jax.experimental.pallas import tpu as pltpu


def _causal_conv1d_kernel(x_ref, halo_ref, w_ref, b_ref, o_ref, *,
                          dilation: int, kernel_size: int, padding: int):
    # x_ref   : (1, C_in, Tt)     current time tile (unpadded input)
    # halo_ref: (1, 1, C_in, P)   left halo for this tile (pre-zeroed before t=0)
    # w_ref   : (C_out, K*C_in)   tap-major flattened weights
    # b_ref   : (C_out, 1)
    # o_ref   : (1, C_out, Tt)
    tt = o_ref.shape[2]
    x_tile = x_ref[0]                                            # (C_in, Tt)

    if padding > 0:
        xp = jnp.concatenate([halo_ref[0, 0], x_tile], axis=-1)  # (C_in, Tt+P)
    else:
        xp = x_tile

    # im2col along sublanes: row j*C_in + c  <->  xp[c, tau + j*dilation].
    taps = [xp[:, j * dilation:j * dilation + tt] for j in range(kernel_size)]
    stacked = taps[0] if kernel_size == 1 else jnp.concatenate(taps, axis=0)

    # Single MXU matmul with f32 accumulation (no input upcast).
    acc = jnp.dot(w_ref[...], stacked, preferred_element_type=jnp.float32)
    acc = acc + b_ref[...].astype(jnp.float32)
    o_ref[0] = acc.astype(o_ref.dtype)


def _choose_t_tile(t, c_in, c_out, k, itemsize, budget=12 * 1024 * 1024):
    """Largest multiple-of-128 divisor of t (<= 2048) whose per-step blocks
    (double-buffered in/out DMA + f32 im2col/accumulator temps) fit a
    conservative VMEM budget.  Falls back to a single full-length tile."""
    if t < 128 or t % 128 != 0:
        return t
    best = None
    for cand in range(128, min(t, 2048) + 1, 128):
        if t % cand != 0:
            continue
        est = cand * (4 * (c_in + c_out) * itemsize          # double-buffered DMA
                      + 4 * (k * c_in + c_in + c_out + c_out))  # f32 temps
        if est <= budget:
            best = cand
    return best if best is not None else t


def causal_conv1d(x, weight, bias, *, dilation: int = 1, t_tile: int | None = None):
    """Causal dilated conv1d matching CausalConv1d.forward.

    x:      (B, C_in, T)
    weight: (C_out, C_in, K)
    bias:   (C_out,)
    returns (B, C_out, T)
    """
    b, c_in, t = x.shape
    c_out, c_in_w, k = weight.shape
    assert c_in == c_in_w
    padding = (k - 1) * dilation

    if t_tile is None:
        t_tile = _choose_t_tile(t, c_in, c_out, k, jnp.dtype(x.dtype).itemsize)
    assert t % t_tile == 0, (t, t_tile)
    nt = t // t_tile

    # Tap-major flattened weight: w2[o, j*C_in + c] = weight[o, c, j].
    w2 = jnp.transpose(weight, (0, 2, 1)).reshape(c_out, k * c_in)
    bias2d = bias.reshape(c_out, 1)

    # Per-tile left halos (B, nt, C_in, P): halos[:, i] = x[:, :, i*Tt-P : i*Tt],
    # zero-filled where indices fall before t=0.  This tiny side array is the
    # only extra HBM traffic -- no full padded copy of x.
    p_h = max(padding, 1)  # dummy width-1 halo when padding == 0 (unused)
    if padding > 0:
        col = (jnp.arange(nt) * t_tile - padding)[:, None] + jnp.arange(padding)[None, :]
        valid = col >= 0                                          # (nt, P)
        gathered = x[:, :, jnp.clip(col, 0, t - 1)]               # (B, C_in, nt, P)
        halos = jnp.where(valid[None, None], gathered, 0)
        halos = jnp.transpose(halos, (0, 2, 1, 3))                # (B, nt, C_in, P)
    else:
        halos = jnp.zeros((b, nt, c_in, p_h), x.dtype)

    kernel = functools.partial(_causal_conv1d_kernel, dilation=dilation,
                               kernel_size=k, padding=padding)

    return pl.pallas_call(
        kernel,
        out_shape=jax.ShapeDtypeStruct((b, c_out, t), x.dtype),
        grid_spec=pltpu.PrefetchScalarGridSpec(
            num_scalar_prefetch=0,
            grid=(b, nt),
            in_specs=[
                pl.BlockSpec((1, c_in, t_tile), lambda bi, ti: (bi, 0, ti)),
                pl.BlockSpec((1, 1, c_in, p_h), lambda bi, ti: (bi, ti, 0, 0)),
                pl.BlockSpec((c_out, k * c_in), lambda bi, ti: (0, 0)),
                pl.BlockSpec((c_out, 1), lambda bi, ti: (0, 0)),
            ],
            out_specs=pl.BlockSpec((1, c_out, t_tile), lambda bi, ti: (bi, 0, ti)),
        ),
        compiler_params=pltpu.CompilerParams(
            dimension_semantics=("parallel", "parallel"),
            vmem_limit_bytes=32 * 1024 * 1024,
        ),
    )(x, halos, w2, bias2d)


def _reference_causal_conv1d(x, weight, bias, *, dilation: int = 1):
    """Pure-JAX reference replicating the PyTorch module exactly."""
    k = weight.shape[2]
    padding = (k - 1) * dilation
    y = jax.lax.conv_general_dilated(
        x, weight,
        window_strides=(1,),
        padding=[(padding, padding)],
        rhs_dilation=(dilation,),
        dimension_numbers=("NCH", "OIH", "NCH"),
    ) + bias.reshape(1, -1, 1)
    if padding != 0:
        y = y[:, :, :-padding]
    return y


if __name__ == "__main__":
    key = jax.random.PRNGKey(0)
    kx1, kw1, kb1, kx2, kw2, kb2 = jax.random.split(key, 6)

    # --- Module-sized test: CausalConv1d(4, 8, kernel_size=3, dilation=2), x (2,4,16) ---
    B, C_IN, C_OUT, K, DIL, T = 2, 4, 8, 3, 2, 16
    bound = 1.0 / (C_IN * K) ** 0.5
    weight = jax.random.uniform(kw1, (C_OUT, C_IN, K), jnp.float32, -bound, bound)
    bias = jax.random.uniform(kb1, (C_OUT,), jnp.float32, -bound, bound)
    x = jax.random.normal(kx1, (B, C_IN, T), jnp.float32)

    y = jax.block_until_ready(causal_conv1d(x, weight, bias, dilation=DIL))
    y_ref = _reference_causal_conv1d(x, weight, bias, dilation=DIL)
    assert y.shape == (B, C_OUT, T), y.shape
    assert jnp.allclose(y, y_ref, atol=1e-5, rtol=1e-5), "small-shape mismatch vs reference"

    # --- Tiled path: multiple 128-lane T tiles with cross-tile halos ---
    B2, C_IN2, C_OUT2, K2, DIL2, T2 = 2, 8, 16, 3, 2, 1024
    bound2 = 1.0 / (C_IN2 * K2) ** 0.5
    weight2 = jax.random.uniform(kw2, (C_OUT2, C_IN2, K2), jnp.float32, -bound2, bound2)
    bias2 = jax.random.uniform(kb2, (C_OUT2,), jnp.float32, -bound2, bound2)
    x2 = jax.random.normal(kx2, (B2, C_IN2, T2), jnp.float32)

    y2 = jax.block_until_ready(
        causal_conv1d(x2, weight2, bias2, dilation=DIL2, t_tile=256))
    y2_ref = _reference_causal_conv1d(x2, weight2, bias2, dilation=DIL2)
    assert jnp.allclose(y2, y2_ref, atol=1e-4, rtol=1e-4), "tiled-path mismatch vs reference"

    print("KERNEL_OK")
</pallas_src>

<mosaic_0001>
module attributes {stable_mosaic.version = 11 : i64} {
  func.func @_causal_conv1d_kernel(%arg0: i32, %arg1: i32, %arg2: memref<1x4x16xf32, #tpu.memory_space<vmem>>, %arg3: memref<1x1x4x4xf32, #tpu.memory_space<vmem>>, %arg4: memref<8x12xf32, #tpu.memory_space<vmem>>, %arg5: memref<8x1xf32, #tpu.memory_space<vmem>>, %arg6: memref<1x8x16xf32, #tpu.memory_space<vmem>>) attributes {dimension_semantics = [#tpu.dimension_semantics<parallel>, #tpu.dimension_semantics<parallel>], iteration_bounds = array<i64: 2, 1>, scalar_prefetch = 0 : i64, scratch_operands = 0 : i64, tpu.core_type = #tpu.core_type<tc>, window_params = [{transform_indices = @transform_0, window_bounds = array<i64: 1, 4, 16>}, {transform_indices = @transform_1, window_bounds = array<i64: 1, 1, 4, 4>}, {pipeline_mode = #tpu.pipeline_mode<synchronous>, transform_indices = @transform_2, window_bounds = array<i64: 8, 12>}, {pipeline_mode = #tpu.pipeline_mode<synchronous>, transform_indices = @transform_3, window_bounds = array<i64: 8, 1>}, {transform_indices = @transform_4, window_bounds = array<i64: 1, 8, 16>}]} {
    %c0 = arith.constant 0 : index
    %c0_0 = arith.constant 0 : index
    %c0_1 = arith.constant 0 : index
    %0 = vector.load %arg2[%c0, %c0_0, %c0_1] : memref<1x4x16xf32, #tpu.memory_space<vmem>>, vector<1x4x16xf32>
    %1 = vector.shape_cast %0 : vector<1x4x16xf32> to vector<4x16xf32>
    %c0_2 = arith.constant 0 : index
    %c0_3 = arith.constant 0 : index
    %c0_4 = arith.constant 0 : index
    %c0_5 = arith.constant 0 : index
    %2 = vector.load %arg3[%c0_2, %c0_3, %c0_4, %c0_5] : memref<1x1x4x4xf32, #tpu.memory_space<vmem>>, vector<1x1x4x4xf32>
    %3 = vector.shape_cast %2 : vector<1x1x4x4xf32> to vector<4x4xf32>
    %4 = tpu.concatenate %3, %1 in 1 : vector<4x4xf32>, vector<4x16xf32> -> vector<4x20xf32>
    %5 = vector.extract_strided_slice %4 {offsets = [0, 0], sizes = [4, 16], strides = [1, 1]} : vector<4x20xf32> to vector<4x16xf32>
    %6 = vector.extract_strided_slice %4 {offsets = [0, 2], sizes = [4, 16], strides = [1, 1]} : vector<4x20xf32> to vector<4x16xf32>
    %7 = vector.extract_strided_slice %4 {offsets = [0, 4], sizes = [4, 16], strides = [1, 1]} : vector<4x20xf32> to vector<4x16xf32>
    %8 = tpu.concatenate %5, %6, %7 in 0 : vector<4x16xf32>, vector<4x16xf32>, vector<4x16xf32> -> vector<12x16xf32>
    %c0_6 = arith.constant 0 : index
    %c0_7 = arith.constant 0 : index
    %9 = vector.load %arg4[%c0_6, %c0_7] : memref<8x12xf32, #tpu.memory_space<vmem>>, vector<8x12xf32>
    %cst = arith.constant dense<0.000000e+00> : vector<8x16xf32>
    %10 = tpu.matmul %9, %8, %cst {dimension_numbers = #tpu.dot_dimension_numbers<[1], [0], [0], [1], [0, 0, 1, 1], [], []>} : vector<8x12xf32>, vector<12x16xf32>, vector<8x16xf32> -> vector<8x16xf32>
    %c0_8 = arith.constant 0 : index
    %c0_9 = arith.constant 0 : index
    %11 = vector.load %arg5[%c0_8, %c0_9] : memref<8x1xf32, #tpu.memory_space<vmem>>, vector<8x1xf32>
    %12 = vector.broadcast %11 : vector<8x1xf32> to vector<8x16xf32>
    %13 = arith.addf %10, %12 : vector<8x16xf32>
    %c0_10 = arith.constant 0 : index
    %c0_11 = arith.constant 0 : index
    %c0_12 = arith.constant 0 : index
    %14 = vector.load %arg6[%c0_10, %c0_11, %c0_12] : memref<1x8x16xf32, #tpu.memory_space<vmem>>, vector<1x8x16xf32>
    %15 = vector.shape_cast %14 : vector<1x8x16xf32> to vector<8x16xf32>
    %16 = vector.shape_cast %13 : vector<8x16xf32> to vector<1x8x16xf32>
    tpu.vector_store %arg6[%c0_10, %c0_11, %c0_12], %16 {strides = array<i32>} : memref<1x8x16xf32, #tpu.memory_space<vmem>>, vector<1x8x16xf32>,
    return
  }
  func.func @transform_0(%arg0: i32, %arg1: i32) -> (i32, i32, i32) {
    %c0_i32 = arith.constant 0 : i32
    %c0_i32_0 = arith.constant 0 : i32
    return %arg0, %c0_i32, %arg1 : i32, i32, i32
  }
  func.func @transform_1(%arg0: i32, %arg1: i32) -> (i32, i32, i32, i32) {
    %c0_i32 = arith.constant 0 : i32
    %c0_i32_0 = arith.constant 0 : i32
    %c0_i32_1 = arith.constant 0 : i32
    return %arg0, %arg1, %c0_i32, %c0_i32_0 : i32, i32, i32, i32
  }
  func.func @transform_2(%arg0: i32, %arg1: i32) -> (i32, i32) {
    %c0_i32 = arith.constant 0 : i32
    %c0_i32_0 = arith.constant 0 : i32
    %c0_i32_1 = arith.constant 0 : i32
    return %c0_i32, %c0_i32_0 : i32, i32
  }
  func.func @transform_3(%arg0: i32, %arg1: i32) -> (i32, i32) {
    %c0_i32 = arith.constant 0 : i32
    %c0_i32_0 = arith.constant 0 : i32
    %c0_i32_1 = arith.constant 0 : i32
    return %c0_i32, %c0_i32_0 : i32, i32
  }
  func.func @transform_4(%arg0: i32, %arg1: i32) -> (i32, i32, i32) {
    %c0_i32 = arith.constant 0 : i32
    %c0_i32_0 = arith.constant 0 : i32
    return %arg0, %c0_i32, %arg1 : i32, i32, i32
  }
}

</mosaic_0001>

<llo_original>
// kernel: tpu_custom_call.1
$region0: #{tpu_custom_call.1}
  #allocation0 [shape = 'u32[]', space=smem, size = 0x4, offset = 0x4, fixed_abs, tag = 'smem constant byte address 0x4 - core index']
  #allocation1 [shape = 'u32[144,128]{1,0:T(1,128)}', space=vmem, size = 0x12000, scoped, tag = 'internal scratch']
  %s0 = inlined_call_operand.vmem [shape: f32[2,4,16], index: 0, kind: input, shape index: {}]
  %s1 = inlined_call_operand.hbm [shape: f32[2,1,4,4], index: 1, kind: input, shape index: {}]
  %s2 = inlined_call_operand.vmem [shape: f32[8,12], index: 2, kind: input, shape index: {}]
  %s3 = inlined_call_operand.vmem [shape: f32[8,1], index: 3, kind: input, shape index: {}]
  %s4 = inlined_call_operand.hbm [shape: f32[2,8,16], index: 4, kind: output, shape index: {}]
  %s5 = sld [smem:[#allocation0]]
  $region53: #{tpu_custom_call.1} parent=0
    _
  %s7 = ssub.s32 1, %s5
  %s8 = scalar_select 0, %s7, %s5
  $region1: #{tpu_custom_call.1} parent=0
    #allocation2 [shape = 'u8[4096]{0}', space=vmem, size = 0x1000, scoped, tag = 'input window, operand 1']
    #allocation3 [shape = 's32[2]{0}', space=sflag, size = 0x8, scoped, tag = 'scoped memory for tpu_custom_call.1']
    #allocation4 [shape = 's32[2]{0}', space=sflag, size = 0x8, scoped, tag = 'scoped memory for tpu_custom_call.1']
    #allocation5 [shape = 'u8[8192]{0}', space=vmem, size = 0x2000, scoped, tag = 'output window, operand 0']
    %9 = vsyncpa [#allocation3], 0
    %s10 = scalar_lea.sflag [#allocation3], 1
    %11 = vsyncpa %s10, 0
    %12 = vsyncpa [#allocation4], 0
    %s13 = scalar_lea.sflag [#allocation4], 1
    %14 = vsyncpa %s13, 0
    loop: start=0, step=1, limit=4
    $region2: #{tpu_custom_call.1} parent=1 // loop_pre_header
      _
    $region3: #{tpu_custom_call.1} parent=1 // loop_header
      %s16 = sphi 0, %s20
      %p17 = scmp.ge.s32.totalorder %s16, 4
      %s23 = sphi 0, %s35
      %s24 = sphi 0, %s31
      %s25 = sphi 0, %s23
      %s26 = sphi 0, %s24
      %s27 = sphi 0, %s25
      %s28 = sphi 0, %s26
      %s40 = sphi 0, %s42
      %s43 = sphi 0, %s40
      %s44 = sphi 0, %s43
      %s60 = sphi 0, %s44
      %s68 = sphi 0, %s70
      %s71 = sphi 0, %s68
      %s72 = sphi 0, %s71
      %s88 = sphi 0, %s72
      %s92 = sphi 0, %s92
      %s94 = sphi 0, %s92
      %s95 = sphi 0, %s94
      %s109 = sphi 0, %s95
      %s113 = sphi 0, %s113
      %s115 = sphi 0, %s113
      %s116 = sphi 0, %s115
      %s130 = sphi 0, %s116
      %s138 = sphi 0, %s140
      %s141 = sphi 0, %s138
      %s142 = sphi 0, %s141
      %s158 = sphi 0, %s142
    $region4: #{tpu_custom_call.1} parent=1 // loop_header_branch
      %19 = sbr.rel (%p17) target = $region8
    $region5: #{tpu_custom_call.1} parent=1 // loop_body
      %s21 = ssub.s32 %s16, 1
      %s22 = ssub.s32 %s16, 2
      %s29 = sadd.s32 1, %s24
      %p30 = scmp.ge.s32.totalorder %s29, 1
      %s31 = scalar_select %p30, 0, %s29
      %s32 = sadd.s32 1, %s23
      %s33 = scalar_select %p30, %s32, %s23
      %p34 = scmp.ge.s32.totalorder %s33, 2
      %s35 = scalar_select %p34, 0, %s33
      %s36 = ssub.s32 %s23, %s35
      %s37 = ssub.s32 %s24, %s31
      %s38 = sor.u32 %s36, %s37
      %p39 = scmp.eq.s32.totalorder %s38, 0
      %s41 = sadd.s32 %s40, 1
      %s42 = scalar_select %p39, %s40, %s41
      %p45 = pneg %p39
      %p46 = scmp.eq.s32.totalorder %s16, 1
      %p47 = por %p45, %p46
      %p48 = scmp.ne.s32.totalorder %s40, %s43
      %p49 = scmp.eq.s32.totalorder %s16, 0
      %p50 = por %p48, %p49
      %p51 = scmp.ne.s32.totalorder %s40, %s43
      %p52 = scmp.eq.s32.totalorder %s21, 1
      %p53 = por %p51, %p52
      %p54 = scmp.ne.s32.totalorder %s43, %s44
      %p55 = scmp.eq.s32.totalorder %s21, 0
      %p56 = por %p54, %p55
      %p57 = scmp.ne.s32.totalorder %s43, %s44
      %p58 = scmp.eq.s32.totalorder %s22, 1
      %p59 = por %p57, %p58
      %p61 = scmp.ne.s32.totalorder %s44, %s60
      %p62 = scmp.eq.s32.totalorder %s22, 0
      %p63 = por %p61, %p62
      %s64 = ssub.s32 %s23, %s35
      %s65 = ssub.s32 %s24, %s31
      %s66 = sor.u32 %s64, %s65
      %p67 = scmp.eq.s32.totalorder %s66, 0
      %s69 = sadd.s32 %s68, 1
      %s70 = scalar_select %p67, %s68, %s69
      %p73 = pneg %p67
      %p74 = scmp.eq.s32.totalorder %s16, 1
      %p75 = por %p73, %p74
      %p76 = scmp.ne.s32.totalorder %s68, %s71
      %p77 = scmp.eq.s32.totalorder %s16, 0
      %p78 = por %p76, %p77
      %p79 = scmp.ne.s32.totalorder %s68, %s71
      %p80 = scmp.eq.s32.totalorder %s21, 1
      %p81 = por %p79, %p80
      %p82 = scmp.ne.s32.totalorder %s71, %s72
      %p83 = scmp.eq.s32.totalorder %s21, 0
      %p84 = por %p82, %p83
      %p85 = scmp.ne.s32.totalorder %s71, %s72
      %p86 = scmp.eq.s32.totalorder %s22, 1
      %p87 = por %p85, %p86
      %p89 = scmp.ne.s32.totalorder %s72, %s88
      %p90 = scmp.eq.s32.totalorder %s22, 0
      %p91 = por %p89, %p90
      %s93 = sadd.s32 %s92, 1
      %p96 = scmp.eq.s32.totalorder %s16, 1
      %p97 = scmp.ne.s32.totalorder %s92, %s94
      %p98 = scmp.eq.s32.totalorder %s16, 0
      %p99 = por %p97, %p98
      %p100 = scmp.ne.s32.totalorder %s92, %s94
      %p101 = scmp.eq.s32.totalorder %s21, 1
      %p102 = por %p100, %p101
      %p103 = scmp.ne.s32.totalorder %s94, %s95
      %p104 = scmp.eq.s32.totalorder %s21, 0
      %p105 = por %p103, %p104
      %p106 = scmp.ne.s32.totalorder %s94, %s95
      %p107 = scmp.eq.s32.totalorder %s22, 1
      %p108 = por %p106, %p107
      %p110 = scmp.ne.s32.totalorder %s95, %s109
      %p111 = scmp.eq.s32.totalorder %s22, 0
      %p112 = por %p110, %p111
      %s114 = sadd.s32 %s113, 1
      %p117 = scmp.eq.s32.totalorder %s16, 1
      %p118 = scmp.ne.s32.totalorder %s113, %s115
      %p119 = scmp.eq.s32.totalorder %s16, 0
      %p120 = por %p118, %p119
      %p121 = scmp.ne.s32.totalorder %s113, %s115
      %p122 = scmp.eq.s32.totalorder %s21, 1
      %p123 = por %p121, %p122
      %p124 = scmp.ne.s32.totalorder %s115, %s116
      %p125 = scmp.eq.s32.totalorder %s21, 0
      %p126 = por %p124, %p125
      %p127 = scmp.ne.s32.totalorder %s115, %s116
      %p128 = scmp.eq.s32.totalorder %s22, 1
      %p129 = por %p127, %p128
      %p131 = scmp.ne.s32.totalorder %s116, %s130
      %p132 = scmp.eq.s32.totalorder %s22, 0
      %p133 = por %p131, %p132
      %s134 = ssub.s32 %s23, %s35
      %s135 = ssub.s32 %s24, %s31
      %s136 = sor.u32 %s134, %s135
      %p137 = scmp.eq.s32.totalorder %s136, 0
      %s139 = sadd.s32 %s138, 1
      %s140 = scalar_select %p137, %s138, %s139
      %p143 = pneg %p137
      %p144 = scmp.eq.s32.totalorder %s16, 1
      %p145 = por %p143, %p144
      %p146 = scmp.ne.s32.totalorder %s138, %s141
      %p147 = scmp.eq.s32.totalorder %s16, 0
      %p148 = por %p146, %p147
      %p149 = scmp.ne.s32.totalorder %s138, %s141
      %p150 = scmp.eq.s32.totalorder %s21, 1
      %p151 = por %p149, %p150
      %p152 = scmp.ne.s32.totalorder %s141, %s142
      %p153 = scmp.eq.s32.totalorder %s21, 0
      %p154 = por %p152, %p153
      %p155 = scmp.ne.s32.totalorder %s141, %s142
      %p156 = scmp.eq.s32.totalorder %s22, 1
      %p157 = por %p155, %p156
      %p159 = scmp.ne.s32.totalorder %s142, %s158
      %p160 = scmp.eq.s32.totalorder %s22, 0
      %p161 = por %p159, %p160
      %p162 = scmp.le.s32.totalorder 1, %s16
      %p163 = scmp.lt.s32.totalorder %s16, 3
      %p164 = pnand %p162, %p163
      %p165 = pneg %p164
      // Predicated region
      $region9: #{tpu_custom_call.1} parent=5 // pred_check
        _
      $region10: #{tpu_custom_call.1} parent=5 // pred_check_branch
        %167 = sbr.rel (%p164) target = $region12
      $region11: #{tpu_custom_call.1} parent=5 // pred_region
        %s168 = ssub.s32 %s16, 1
        // Predicated region
        $region13: #{tpu_custom_call.1} parent=11 // pred_check
          %p169 = pneg %p105
        $region14: #{tpu_custom_call.1} parent=11 // pred_check_branch
          %171 = sbr.rel (%p169) target = $region16
        $region15: #{tpu_custom_call.1} parent=11 // pred_region
          _
        $region16: #{tpu_custom_call.1} parent=11 // pred_fallthru
          _
        // Predicated region
        $region17: #{tpu_custom_call.1} parent=11 // pred_check
          %p172 = pneg %p126
        $region18: #{tpu_custom_call.1} parent=11 // pred_check_branch
          %174 = sbr.rel (%p172) target = $region20
        $region19: #{tpu_custom_call.1} parent=11 // pred_region
          _
        $region20: #{tpu_custom_call.1} parent=11 // pred_fallthru
          _
      $region12: #{tpu_custom_call.1} parent=5 // pred_fallthru
        _
      %p175 = scmp.lt.s32.totalorder %s16, 2
      // Predicated region
      $region21: #{tpu_custom_call.1} parent=5 // pred_check
        %p176 = pneg %p175
      $region22: #{tpu_custom_call.1} parent=5 // pred_check_branch
        %178 = sbr.rel (%p176) target = $region24
      $region23: #{tpu_custom_call.1} parent=5 // pred_region
        // Predicated region
        $region25: #{tpu_custom_call.1} parent=23 // pred_check
          %p179 = pneg %p50
        $region26: #{tpu_custom_call.1} parent=23 // pred_check_branch
          %181 = sbr.rel (%p179) target = $region28
        $region27: #{tpu_custom_call.1} parent=23 // pred_region
          %p182 = scmp.lt.s32.totalorder %s23, 1
          %s183 = scalar_select %p182, %s23, 1
          %p184 = scmp.lt.s32.totalorder %s24, 0
          %s185 = scalar_select %p184, %s24, 0
          %s186 = sadd.s32 %s185, %s183
          %s187 = smul.addr %s186, 4
          %s188 = scalar_lea.vmem %s0, %s187
        $region28: #{tpu_custom_call.1} parent=23 // pred_fallthru
          _
        // Predicated region
        $region29: #{tpu_custom_call.1} parent=23 // pred_check
          %p189 = pneg %p78
        $region30: #{tpu_custom_call.1} parent=23 // pred_check_branch
          %191 = sbr.rel (%p189) target = $region32
        $region31: #{tpu_custom_call.1} parent=23 // pred_region
          %s192 = sand.u32 %s68, 1
          %s193 = scalar_lea.sflag [#allocation3], %s192
          %s194 = sand.u32 %s68, 1
          %s195 = smul.addr %s194, 4
          %s196 = scalar_lea.vmem [#allocation2], %s195
          %s198 = ssub.s32 64, 64
          %199 = vsyncadd %s193, %s198
          %s200 = sadd.s32 %s24, %s23
          %s201 = smul.addr %s200, 64
          %s202 = scalar_lea.hbm %s1, %s201
          %s204 = sshll.u32 %s196, 4
          %s205 = int_to_ptr.vmem [resolvable:$true] %s204
          %207 = dma.hbm_to_vmem [thread:$0]  %s202, 64, %s205, %s193
        $region32: #{tpu_custom_call.1} parent=23 // pred_fallthru
          _
      $region24: #{tpu_custom_call.1} parent=5 // pred_fallthru
        _
      %p208 = scmp.le.s32.totalorder 1, %s16
      %p209 = scmp.lt.s32.totalorder %s16, 3
      %p210 = pnand %p208, %p209
      %p211 = pneg %p210
      // Predicated region
      $region33: #{tpu_custom_call.1} parent=5 // pred_check
        _
      $region34: #{tpu_custom_call.1} parent=5 // pred_check_branch
        %213 = sbr.rel (%p210) target = $region36
      $region35: #{tpu_custom_call.1} parent=5 // pred_region
        %s214 = ssub.s32 %s16, 1
        %s215 = sand.u32 %s71, 1
        %s216 = scalar_lea.sflag [#allocation3], %s215
        %s217 = sand.u32 %s71, 1
        %s218 = smul.addr %s217, 4
        %s219 = scalar_lea.vmem [#allocation2], %s218
        // Predicated region
        $region37: #{tpu_custom_call.1} parent=35 // pred_check
          %p220 = pneg %p84
        $region38: #{tpu_custom_call.1} parent=35 // pred_check_branch
          %222 = sbr.rel (%p220) target = $region40
        $region39: #{tpu_custom_call.1} parent=35 // pred_region
          %223 = dma.done %s216, 64
        $region40: #{tpu_custom_call.1} parent=35 // pred_fallthru
          _
        %p224 = scmp.lt.s32.totalorder %s25, 1
        %s225 = scalar_select %p224, %s25, 1
        %p226 = scmp.lt.s32.totalorder %s26, 0
        %s227 = scalar_select %p226, %s26, 0
        %s228 = sadd.s32 %s227, %s225
        %s229 = smul.addr %s228, 4
        %s230 = scalar_lea.vmem %s0, %s229
        %p231 = pneg %p56
        %p232 = pneg %p53
        %s233 = sand.u32 %s71, 1
        %s234 = scalar_lea.sflag [#allocation3], %s233
        %s235 = sand.u32 %s71, 1
        %s236 = smul.addr %s235, 4
        %s237 = scalar_lea.vmem [#allocation2], %s236
        %p238 = pneg %p84
        %p239 = pneg %p81
        %p240 = pneg %p105
        %p241 = pneg %p102
        %p242 = pneg %p126
        %p243 = pneg %p123
        %p244 = pneg %p154
        %p245 = pneg %p151
        %s246 = sand.u32 %s141, 1
        %s247 = scalar_lea.sflag [#allocation4], %s246
        %s248 = sand.u32 %s141, 1
        %s249 = smul.addr %s248, 8
        %s250 = scalar_lea.vmem [#allocation5], %s249
        %p251 = scmp.lt.s32.totalorder %s25, 1
        %s252 = scalar_select %p251, %s25, 1
        %p253 = scmp.lt.s32.totalorder %s26, 0
        %s254 = scalar_select %p253, %s26, 0
        %s255 = sadd.s32 %s254, %s252
        %s256 = smul.addr %s255, 4
        %s257 = scalar_lea.vmem %s0, %s256
        %v258 = vld [vmem:[%s257] sm:$0xf]
        %v259 = vld [vmem:[%s219] sm:$0xf]
        %261 = vrot.lane.b32.xlu0 %v258, 4
        %v262 = vpop.permute.xlu0 %261
        %vm264 = vcmask 31744
        %v265 = vsel %vm264, %v259, %v262
        %v267 = vrot.slane %v265, 4
        %268 = vrot.lane.b32.xlu0 %v267, 126
        %v269 = vpop.permute.xlu0 %268
        %271 = vrot.lane.b32.xlu0 %v265, 124
        %v272 = vpop.permute.xlu0 %271
        %vm273 = vcmask 1043456
        %v274 = vsel %vm273, %v265, %v269
        %v275 = vld [vmem:[%s2] sm:$0xff]
        %v276 = vld [vmem:[%s3] sm:$0xff]
        %278 = vset.pattern.permute.xlu0 0
        %279 = vperm.xlu0 %278, %v276
        %v280 = vpop.permute.xlu0 %279
        %vm282 = vcmask 97280
        %v284 = vsel %vm282, %v275, 0
        %v286 = vsel %vm273, %v272, 0
        %288 = vmatprep.subr.mxu0 0.0
        %289 = vmatpush1.msra.mxu0 %v274
        %290 = vmatprep.subr.mxu0 0.0
        %291 = vmatpush1.msra.mxu0 %v286
        %292 = vmatprep.subr.mxu0 0.0
        %293 = vmatpush1.msra.mxu0 0.0
        %294 = vmatprep.subr.mxu0 0.0
        %295 = vmatpush1.msra.mxu0 0.0
        %296 = vmatprep.subr.mxu0 0.0
        %297 = vmatpush1.msra.mxu0 0.0
        %298 = vmatprep.subr.mxu0 0.0
        %299 = vmatpush1.msra.mxu0 0.0
        %300 = vmatprep.subr.mxu0 0.0
        %301 = vmatpush1.msra.mxu0 0.0
        %302 = vmatprep.subr.mxu0 0.0
        %303 = vmatpush1.msra.mxu0 0.0
        %304 = vmatprep.subr.mxu0 0.0
        %305 = vmatpush1.msra.mxu0 0.0
        %306 = vmatprep.subr.mxu0 0.0
        %307 = vmatpush1.msra.mxu0 0.0
        %308 = vmatprep.subr.mxu0 0.0
        %309 = vmatpush1.msra.mxu0 0.0
        %310 = vmatprep.subr.mxu0 0.0
        %311 = vmatpush1.msra.mxu0 0.0
        %312 = vmatprep.subr.mxu0 0.0
        %313 = vmatpush1.msra.mxu0 0.0
        %314 = vmatprep.subr.mxu0 0.0
        %315 = vmatpush1.msra.mxu0 0.0
        %316 = vmatprep.subr.mxu0 0.0
        %317 = vmatpush1.msra.mxu0 0.0
        %318 = vmatprep.subr.mxu0 0.0
        %319 = vmatpush1.msra.mxu0 0.0
        %320 = vmatprep.subr.mxu0 0.0
        %321 = vmatpush1.msra.mxu0 0.0
        %322 = vmatprep.subr.mxu0 0.0
        %323 = vmatpush1.msra.mxu0 0.0
        %324 = vmatprep.subr.mxu0 0.0
        %325 = vmatpush1.msra.mxu0 0.0
        %326 = vmatprep.subr.mxu0 0.0
        %327 = vmatpush1.msra.mxu0 0.0
        %328 = vmatprep.subr.mxu0 0.0
        %329 = vmatpush1.msra.mxu0 0.0
        %330 = vmatprep.subr.mxu0 0.0
        %331 = vmatpush1.msra.mxu0 0.0
        %332 = vmatprep.subr.mxu0 0.0
        %333 = vmatpush1.msra.mxu0 0.0
        %334 = vmatprep.subr.mxu0 0.0
        %335 = vmatpush1.msra.mxu0 0.0
        %336 = vmatprep.subr.mxu0 0.0
        %337 = vmatpush1.msra.mxu0 0.0
        %338 = vmatprep.subr.mxu0 0.0
        %339 = vmatpush1.msra.mxu0 0.0
        %340 = vmatprep.subr.mxu0 0.0
        %341 = vmatpush1.msra.mxu0 0.0
        %342 = vmatprep.subr.mxu0 0.0
        %343 = vmatpush1.msra.mxu0 0.0
        %344 = vmatprep.subr.mxu0 0.0
        %345 = vmatpush1.msra.mxu0 0.0
        %346 = vmatprep.subr.mxu0 0.0
        %347 = vmatpush1.msra.mxu0 0.0
        %348 = vmatprep.subr.mxu0 0.0
        %349 = vmatpush1.msra.mxu0 0.0
        %350 = vmatprep.subr.mxu0 0.0
        %351 = vmatpush1.msra.mxu0 0.0
        %352 = vmatprep.mubr.f32.mxu0 0.0
        %353 = vmatmul.mubr.f32.gmra.mrb[0].mxu0 %v284
        %v354 = vpop.f32.mrb[0].mxu0
        %v355 = vadd.f32 %v280, %v354
        %v356 = vpop.f32.mrb[0].mxu0
        %357 = vdwg.mxu0
        %vm358 = vcmask 130048
        %359 = vst.msk [vmem:[%s250] sm:$0xff] %vm358, %v355
        %s360 = sand.u32 %s141, 1
        %s361 = scalar_lea.sflag [#allocation4], %s360
        %s362 = sand.u32 %s141, 1
        %s363 = smul.addr %s362, 8
        %s364 = scalar_lea.vmem [#allocation5], %s363
        // Predicated region
        $region41: #{tpu_custom_call.1} parent=35 // pred_check
          %p365 = pneg %p151
        $region42: #{tpu_custom_call.1} parent=35 // pred_check_branch
          %367 = sbr.rel (%p365) target = $region44
        $region43: #{tpu_custom_call.1} parent=35 // pred_region
          %s369 = ssub.s32 128, 128
          %370 = vsyncadd %s361, %s369
          %s371 = sadd.s32 %s26, %s25
          %s372 = smul.addr %s371, 128
          %s373 = scalar_lea.hbm %s4, %s372
          %s375 = sshll.u32 %s364, 4
          %s376 = int_to_ptr.vmem [resolvable:$true] %s375
          %378 = dma.vmem_to_hbm [thread:$0]  %s376, 128, %s373, %s361
        $region44: #{tpu_custom_call.1} parent=35 // pred_fallthru
          _
      $region36: #{tpu_custom_call.1} parent=5 // pred_fallthru
        _
      %p379 = scmp.le.s32.totalorder 2, %s16
      // Predicated region
      $region45: #{tpu_custom_call.1} parent=5 // pred_check
        %p380 = pneg %p379
      $region46: #{tpu_custom_call.1} parent=5 // pred_check_branch
        %382 = sbr.rel (%p380) target = $region48
      $region47: #{tpu_custom_call.1} parent=5 // pred_region
        %s383 = ssub.s32 %s16, 2
        // Predicated region
        $region49: #{tpu_custom_call.1} parent=47 // pred_check
          %p384 = pneg %p157
        $region50: #{tpu_custom_call.1} parent=47 // pred_check_branch
          %386 = sbr.rel (%p384) target = $region52
        $region51: #{tpu_custom_call.1} parent=47 // pred_region
          %s387 = sand.u32 %s142, 1
          %s388 = scalar_lea.sflag [#allocation4], %s387
          %s389 = sand.u32 %s142, 1
          %s390 = smul.addr %s389, 8
          %s391 = scalar_lea.vmem [#allocation5], %s390
          %392 = dma.done %s388, 128
        $region52: #{tpu_custom_call.1} parent=47 // pred_fallthru
          _
      $region48: #{tpu_custom_call.1} parent=5 // pred_fallthru
        _
    $region6: #{tpu_custom_call.1} parent=1 // loop_footer
      %s20 = sadd.s32 1, %s16
    $region7: #{tpu_custom_call.1} parent=1 // loop_footer_branch
      %15 = sbr.rel target = $region3
    $region8: #{tpu_custom_call.1} parent=1 // loop_exit
      _
    %393 = vsyncpa [#allocation3], 1
    %s394 = scalar_lea.sflag [#allocation3], 1
    %395 = vsyncpa %s394, 1
    %396 = vsyncpa [#allocation4], 1
    %s397 = scalar_lea.sflag [#allocation4], 1
    %398 = vsyncpa %s397, 1

</llo_original>
